<compile_context>
chip_gen: v7x
topology: tpu7x:2x2x1
jax: 0.10.0
libtpu: 0.0.40
codegen_flags: <defaults>
</compile_context>

<pallas_src>
import functools
import math

import jax
import jax.numpy as jnp
from jax.experimental import pallas as pl
from jax.experimental.pallas import tpu as pltpu

_LANE = 128      # output lane padding (pred_len -> 128 for a dense store)
_TK_MAX = 512    # rows of W1 streamed per grid step when N is large


def _gelu(x, use_tanh):
    if use_tanh:
        # tanh-approx GELU routes the transcendental through the EUP; numerics
        # differ slightly from PyTorch nn.GELU() default, so off by default.
        c = 0.7978845608028654  # sqrt(2/pi)
        return 0.5 * x * (1.0 + jnp.tanh(c * (x + 0.044715 * x * x * x)))
    # PyTorch nn.GELU() default: exact erf-based GELU.
    return 0.5 * x * (1.0 + jax.lax.erf(x * 0.7071067811865476))


def _round_up(v, m):
    return (v + m - 1) // m * m


def mlp_norm_kernel(enc_in, seq_len, nk, tk, use_tanh_gelu,
                    xf_ref, chin_ref, chout_ref,
                    w1_ref, b1_ref, w2_ref, b2_ref, w3_ref, b3_ref,
                    out_ref,
                    xn_s, mean_s, std_s, acc_s):
    """Grid = (nk,) "arbitrary" reduction over the N = seq_len*enc_in axis.

    Resident (constant index_map) operands:
      xf     : (B, Npad) f32  flattened (time-major) input, zero-padded to Npad
      ch_in  : (1, Npad) i32  lane -> channel id (lane % enc_in), -1 on padding
      ch_out : (1, PP)  i32   output lane -> channel id (lane if < pred_len else -1)
      b1, b2 : (1, D)  f32    w2 : (D, D) bf16
      w3     : (D, PP) bf16   b3 : (1, PP) f32   (output dim zero-padded to PP)
      out    : (B, B, PP) f32 (wrapper slices [..., :pred_len])
    Streamed per step:
      w1     : (tk, D) bf16 K-block of the (Npad, D) first-layer weight
    Scratch (persists across grid steps):
      xn_s   : (nk, B, tk) bf16 normalized input chunks
      mean_s, std_s : (B, PP) f32 per-channel stats for the final de-norm
      acc_s  : (B, D) f32 first-matmul accumulator
    """
    k = pl.program_id(0)

    # ---- step 0: fused single-pass stats + normalization -------------------
    @pl.when(k == 0)
    def _():
        xf = xf_ref[...]                               # (B, Npad) f32
        ch_in = chin_ref[...]                          # (1, Npad) i32
        ch_out = chout_ref[...]                        # (1, PP)  i32
        inv_L = 1.0 / float(seq_len)

        xsq = xf * xf
        mean_flat = jnp.zeros_like(xf)
        inv_flat = jnp.zeros_like(xf)
        mean_out = jnp.zeros(mean_s.shape, jnp.float32)
        std_out = jnp.zeros(std_s.shape, jnp.float32)
        # Static loop over channels (enc_in small): 2 masked lane reductions per
        # channel; var = E[x^2] - mean^2 (single pass over x).
        for c in range(enc_in):
            m_in = ch_in == c                          # (1, Npad) bool
            m_out = ch_out == c                        # (1, PP)  bool
            s1 = jnp.sum(jnp.where(m_in, xf, 0.0), axis=1, keepdims=True) * inv_L
            s2 = jnp.sum(jnp.where(m_in, xsq, 0.0), axis=1, keepdims=True) * inv_L
            var_c = jnp.maximum(s2 - s1 * s1, 0.0)     # (B, 1)
            std_c = jnp.sqrt(var_c + 1e-5)
            inv_c = 1.0 / std_c                        # exact; only (B, 1) wide
            mean_flat = jnp.where(m_in, s1, mean_flat)
            inv_flat = jnp.where(m_in, inv_c, inv_flat)
            mean_out = jnp.where(m_out, s1, mean_out)
            std_out = jnp.where(m_out, std_c, std_out)

        mean_s[...] = mean_out
        std_s[...] = std_out
        acc_s[...] = jnp.zeros_like(acc_s)

        # Normalize in the flat domain (padded lanes stay exactly 0: mean/inv
        # there are 0) and stash bf16 chunks for the K-tiled matmul.
        xn = ((xf - mean_flat) * inv_flat).astype(jnp.bfloat16)
        for kk in range(nk):                           # static chunk scatter
            xn_s[kk] = xn[:, kk * tk:(kk + 1) * tk]

    # ---- every step: accumulate one K-block of the first matmul (MXU) ------
    acc_s[...] += jnp.dot(xn_s[k], w1_ref[...],
                          preferred_element_type=jnp.float32)

    # ---- last step: rest of the MLP + de-normalization ---------------------
    @pl.when(k == nk - 1)
    def _():
        h = acc_s[...] + b1_ref[...]                   # (B, D) f32
        h = _gelu(h, use_tanh_gelu).astype(jnp.bfloat16)
        h = jnp.dot(h, w2_ref[...], preferred_element_type=jnp.float32) + b2_ref[...]
        h = _gelu(h, use_tanh_gelu).astype(jnp.bfloat16)
        dec = jnp.dot(h, w3_ref[...], preferred_element_type=jnp.float32) + b3_ref[...]

        # PyTorch broadcast: (B,P)*(B,1,C)+(B,1,C) -> (B,B,P); padded lanes are 0
        # because dec/mean are 0 there.
        out_ref[...] = (dec[None, :, :] * std_s[...][:, None, :]
                        + mean_s[...][:, None, :]).astype(out_ref.dtype)


def make_model_params(key, seq_len, pred_len, enc_in, d_model):
    """Deterministic init mimicking PyTorch Linear default U[-1/sqrt(fan_in), ...]."""
    n_in = seq_len * enc_in
    dims = [(n_in, d_model), (d_model, d_model), (d_model, pred_len)]
    params = []
    for (fi, fo) in dims:
        key, kw, kb = jax.random.split(key, 3)
        bound = 1.0 / math.sqrt(fi)
        W = jax.random.uniform(kw, (fi, fo), jnp.float32, -bound, bound)
        b = jax.random.uniform(kb, (1, fo), jnp.float32, -bound, bound)
        params.append((W, b))
    return params


def _vmem_limit_bytes(footprint_bytes):
    cap = 64 * 1024 * 1024                 # conservative fallback (v7x per-core)
    try:
        info = pltpu.get_tpu_info()
        cap = int(getattr(info, "vmem_capacity_bytes", cap))
    except Exception:
        pass
    want = 2 * footprint_bytes + (4 << 20)
    return int(min(max(want, 16 << 20), cap // 2))


def model_forward(x, params, seq_len, pred_len, enc_in, *, use_tanh_gelu=False):
    B, L, C = x.shape
    assert L == seq_len and C == enc_in
    # The torch broadcast (B,P)*(B,1,C) only works (and gives (B,B,P)) when P == C.
    assert pred_len == enc_in, "PyTorch forward requires pred_len == enc_in"
    N = L * C
    PP = _round_up(max(pred_len, _LANE), _LANE)        # lane-dense output width

    (W1, b1), (W2, b2), (W3, b3) = params
    D = W1.shape[1]

    # --- K tiling of the first matmul (streams W1, bounds VMEM) -------------
    if N <= _TK_MAX:
        tk, nk, Npad = N, 1, N
    else:
        tk = _TK_MAX
        nk = -(-N // tk)
        Npad = nk * tk

    # --- wrapper-side layout plumbing (weight-sized / tiny int rows only) ---
    xf = x.reshape(B, N)                               # same as torch .view
    if Npad != N:
        xf = jnp.pad(xf, ((0, 0), (0, Npad - N)))
    ch_in = jnp.arange(N, dtype=jnp.int32) % C
    if Npad != N:
        ch_in = jnp.pad(ch_in, (0, Npad - N), constant_values=-1)
    ch_in = ch_in.reshape(1, Npad)
    lanes = jnp.arange(PP, dtype=jnp.int32)
    ch_out = jnp.where(lanes < pred_len, lanes, -1).reshape(1, PP)

    w1 = W1.astype(jnp.bfloat16)
    if Npad != N:
        w1 = jnp.pad(w1, ((0, Npad - N), (0, 0)))
    w2 = W2.astype(jnp.bfloat16)
    w3 = jnp.pad(W3, ((0, 0), (0, PP - pred_len))).astype(jnp.bfloat16)
    b3p = jnp.pad(b3, ((0, 0), (0, PP - pred_len)))

    # --- cost estimate & right-sized VMEM request ----------------------------
    flops = 2 * B * (Npad * D + D * D + D * PP) + 10 * B * Npad + 4 * B * B * PP
    transcendentals = 2 * B * D + B * C
    in_bytes = ((xf.size + ch_in.size + ch_out.size + b1.size + b2.size + b3p.size) * 4
                + (w1.size + w2.size + w3.size) * 2)
    out_bytes = B * B * PP * 4
    scratch_bytes = nk * B * tk * 2 + 2 * B * PP * 4 + B * D * 4
    footprint = in_bytes + out_bytes + scratch_bytes + 2 * tk * D * 2  # 2x W1 block

    grid_spec = pltpu.PrefetchScalarGridSpec(
        num_scalar_prefetch=0,
        grid=(nk,),
        in_specs=[
            pl.BlockSpec((B, Npad), lambda k: (0, 0)),     # xf (resident)
            pl.BlockSpec((1, Npad), lambda k: (0, 0)),     # ch_in
            pl.BlockSpec((1, PP), lambda k: (0, 0)),       # ch_out
            pl.BlockSpec((tk, D), lambda k: (k, 0)),       # W1 (streamed over K)
            pl.BlockSpec((1, D), lambda k: (0, 0)),        # b1
            pl.BlockSpec((D, D), lambda k: (0, 0)),        # w2
            pl.BlockSpec((1, D), lambda k: (0, 0)),        # b2
            pl.BlockSpec((D, PP), lambda k: (0, 0)),       # w3 (lane-padded)
            pl.BlockSpec((1, PP), lambda k: (0, 0)),       # b3 (lane-padded)
        ],
        out_specs=pl.BlockSpec((B, B, PP), lambda k: (0, 0, 0)),
        scratch_shapes=[
            pltpu.VMEM((nk, B, tk), jnp.bfloat16),         # xn chunks
            pltpu.VMEM((B, PP), jnp.float32),              # per-channel mean
            pltpu.VMEM((B, PP), jnp.float32),              # per-channel std
            pltpu.VMEM((B, D), jnp.float32),               # first-matmul acc
        ],
    )

    kernel = functools.partial(mlp_norm_kernel, C, L, nk, tk, use_tanh_gelu)
    out = pl.pallas_call(
        kernel,
        out_shape=jax.ShapeDtypeStruct((B, B, PP), jnp.float32),
        grid_spec=grid_spec,
        compiler_params=pltpu.CompilerParams(
            dimension_semantics=("arbitrary",),
            vmem_limit_bytes=_vmem_limit_bytes(footprint),
        ),
        cost_estimate=pl.CostEstimate(flops=flops,
                                      transcendentals=transcendentals,
                                      bytes_accessed=in_bytes + out_bytes),
    )(xf, ch_in, ch_out, w1, b1, w2, b2, w3, b3p)

    # TODO(synk): for large B, store (B*B, pred_len) unpadded instead of the
    # lane-dense (B, B, 128) slab (padding is ~43x writeback at pred_len=3).
    # TODO(synk): add a "parallel" batch/column grid axis to engage the second
    # TensorCore on v7x once shapes are large enough to matter.
    return out[..., :pred_len]                              # (B, B, pred_len)


def model_reference(x, params):
    """Pure-JAX f32 replica of the PyTorch forward, for validation."""
    (W1, b1), (W2, b2), (W3, b3) = params
    mean_enc = x.mean(axis=1, keepdims=True)                # (B,1,C)
    xc = x - mean_enc
    var = jnp.mean((xc - xc.mean(axis=1, keepdims=True)) ** 2, axis=1, keepdims=True)
    std_enc = jnp.sqrt(var + 1e-5)                          # (B,1,C)
    xn = xc / std_enc
    xf = xn.reshape(x.shape[0], -1)
    h = _gelu(xf @ W1 + b1, False)
    h = _gelu(h @ W2 + b2, False)
    dec = h @ W3 + b3                                       # (B,P)
    return dec * std_enc + mean_enc                         # broadcast -> (B,B,P)


if __name__ == "__main__":
    B, seq_len, pred_len, enc_in, d_model = 2, 8, 3, 3, 64

    key = jax.random.PRNGKey(0)
    kx, kp = jax.random.split(key)
    x = jax.random.normal(kx, (B, seq_len, enc_in), jnp.float32)
    params = make_model_params(kp, seq_len, pred_len, enc_in, d_model)

    out = model_forward(x, params, seq_len, pred_len, enc_in)
    out = jax.block_until_ready(out)

    ref = model_reference(x, params)
    assert out.shape == (B, B, pred_len), out.shape
    # Tolerance accounts for bf16 MXU operands vs the f32 reference.
    assert jnp.allclose(out, ref, rtol=2e-2, atol=2e-2), (
        float(jnp.max(jnp.abs(out - ref))))

    print("KERNEL_OK")
</pallas_src>

<mosaic_0001>
module attributes {stable_mosaic.version = 11 : i64} {
  func.func @mlp_norm_kernel(%arg0: i32, %arg1: memref<2x24xf32, #tpu.memory_space<vmem>>, %arg2: memref<1x24xi32, #tpu.memory_space<vmem>>, %arg3: memref<1x128xi32, #tpu.memory_space<vmem>>, %arg4: memref<24x64xbf16, #tpu.memory_space<vmem>>, %arg5: memref<1x64xf32, #tpu.memory_space<vmem>>, %arg6: memref<64x64xbf16, #tpu.memory_space<vmem>>, %arg7: memref<1x64xf32, #tpu.memory_space<vmem>>, %arg8: memref<64x128xbf16, #tpu.memory_space<vmem>>, %arg9: memref<1x128xf32, #tpu.memory_space<vmem>>, %arg10: memref<2x2x128xf32, #tpu.memory_space<vmem>>, %arg11: memref<1x2x24xbf16, #tpu.memory_space<vmem>>, %arg12: memref<2x128xf32, #tpu.memory_space<vmem>>, %arg13: memref<2x128xf32, #tpu.memory_space<vmem>>, %arg14: memref<2x64xf32, #tpu.memory_space<vmem>>) attributes {dimension_semantics = [#tpu.dimension_semantics<arbitrary>], iteration_bounds = array<i64: 1>, scalar_prefetch = 0 : i64, scratch_operands = 4 : i64, tpu.core_type = #tpu.core_type<tc>, window_params = [{pipeline_mode = #tpu.pipeline_mode<synchronous>, transform_indices = @transform_0, window_bounds = array<i64: 2, 24>}, {pipeline_mode = #tpu.pipeline_mode<synchronous>, transform_indices = @transform_1, window_bounds = array<i64: 1, 24>}, {pipeline_mode = #tpu.pipeline_mode<synchronous>, transform_indices = @transform_2, window_bounds = array<i64: 1, 128>}, {transform_indices = @transform_3, window_bounds = array<i64: 24, 64>}, {pipeline_mode = #tpu.pipeline_mode<synchronous>, transform_indices = @transform_4, window_bounds = array<i64: 1, 64>}, {pipeline_mode = #tpu.pipeline_mode<synchronous>, transform_indices = @transform_5, window_bounds = array<i64: 64, 64>}, {pipeline_mode = #tpu.pipeline_mode<synchronous>, transform_indices = @transform_6, window_bounds = array<i64: 1, 64>}, {pipeline_mode = #tpu.pipeline_mode<synchronous>, transform_indices = @transform_7, window_bounds = array<i64: 64, 128>}, {pipeline_mode = #tpu.pipeline_mode<synchronous>, transform_indices = @transform_8, window_bounds = array<i64: 1, 128>}, {pipeline_mode = #tpu.pipeline_mode<synchronous>, transform_indices = @transform_9, window_bounds = array<i64: 2, 2, 128>}]} {
    %c0_i32 = arith.constant 0 : i32
    %0 = arith.cmpi eq, %arg0, %c0_i32 : i32
    %1 = arith.extui %0 : i1 to i32
    %c0_i32_0 = arith.constant 0 : i32
    %2 = arith.cmpi ne, %1, %c0_i32_0 : i32
    scf.if %2 {
      %c0_10 = arith.constant 0 : index
      %c0_11 = arith.constant 0 : index
      %14 = vector.load %arg1[%c0_10, %c0_11] : memref<2x24xf32, #tpu.memory_space<vmem>>, vector<2x24xf32>
      %c0_12 = arith.constant 0 : index
      %c0_13 = arith.constant 0 : index
      %15 = vector.load %arg2[%c0_12, %c0_13] : memref<1x24xi32, #tpu.memory_space<vmem>>, vector<1x24xi32>
      %c0_14 = arith.constant 0 : index
      %c0_15 = arith.constant 0 : index
      %16 = vector.load %arg3[%c0_14, %c0_15] : memref<1x128xi32, #tpu.memory_space<vmem>>, vector<1x128xi32>
      %17 = arith.mulf %14, %14 : vector<2x24xf32>
      %cst_16 = arith.constant 0.000000e+00 : f32
      %18 = vector.broadcast %cst_16 : f32 to vector<2x24xf32>
      %cst_17 = arith.constant 0.000000e+00 : f32
      %19 = vector.broadcast %cst_17 : f32 to vector<2x24xf32>
      %cst_18 = arith.constant 0.000000e+00 : f32
      %20 = vector.broadcast %cst_18 : f32 to vector<2x128xf32>
      %cst_19 = arith.constant 0.000000e+00 : f32
      %21 = vector.broadcast %cst_19 : f32 to vector<2x128xf32>
      %c0_i32_20 = arith.constant 0 : i32
      %22 = vector.broadcast %c0_i32_20 : i32 to vector<1x24xi32>
      %23 = arith.cmpi eq, %15, %22 : vector<1x24xi32>
      %c0_i32_21 = arith.constant 0 : i32
      %24 = vector.broadcast %c0_i32_21 : i32 to vector<1x128xi32>
      %25 = arith.cmpi eq, %16, %24 : vector<1x128xi32>
      %cst_22 = arith.constant 0.000000e+00 : f32
      %26 = vector.shape_cast %23 : vector<1x24xi1> to vector<1x24xi1>
      %27 = vector.broadcast %26 : vector<1x24xi1> to vector<2x24xi1>
      %28 = vector.broadcast %cst_22 : f32 to vector<2x24xf32>
      %29 = arith.select %27, %14, %28 : vector<2x24xi1>, vector<2x24xf32>
      %cst_23 = arith.constant dense<0.000000e+00> : vector<2xf32>
      %30 = vector.multi_reduction <add>, %29, %cst_23 [1] : vector<2x24xf32> to vector<2xf32>
      %31 = vector.shape_cast %30 : vector<2xf32> to vector<2x1xf32>
      %cst_24 = arith.constant 1.250000e-01 : f32
      %32 = vector.broadcast %cst_24 : f32 to vector<2x1xf32>
      %33 = arith.mulf %31, %32 : vector<2x1xf32>
      %cst_25 = arith.constant 0.000000e+00 : f32
      %34 = vector.shape_cast %23 : vector<1x24xi1> to vector<1x24xi1>
      %35 = vector.broadcast %34 : vector<1x24xi1> to vector<2x24xi1>
      %36 = vector.broadcast %cst_25 : f32 to vector<2x24xf32>
      %37 = arith.select %35, %17, %36 : vector<2x24xi1>, vector<2x24xf32>
      %cst_26 = arith.constant dense<0.000000e+00> : vector<2xf32>
      %38 = vector.multi_reduction <add>, %37, %cst_26 [1] : vector<2x24xf32> to vector<2xf32>
      %39 = vector.shape_cast %38 : vector<2xf32> to vector<2x1xf32>
      %cst_27 = arith.constant 1.250000e-01 : f32
      %40 = vector.broadcast %cst_27 : f32 to vector<2x1xf32>
      %41 = arith.mulf %39, %40 : vector<2x1xf32>
      %42 = arith.mulf %33, %33 : vector<2x1xf32>
      %43 = arith.subf %41, %42 : vector<2x1xf32>
      %cst_28 = arith.constant 0.000000e+00 : f32
      %44 = vector.broadcast %cst_28 : f32 to vector<2x1xf32>
      %45 = arith.maximumf %43, %44 : vector<2x1xf32>
      %cst_29 = arith.constant 9.99999974E-6 : f32
      %46 = vector.broadcast %cst_29 : f32 to vector<2x1xf32>
      %47 = arith.addf %45, %46 : vector<2x1xf32>
      %48 = math.sqrt %47 : vector<2x1xf32>
      %cst_30 = arith.constant 1.000000e+00 : f32
      %49 = vector.broadcast %cst_30 : f32 to vector<2x1xf32>
      %50 = arith.divf %49, %48 : vector<2x1xf32>
      %51 = vector.shape_cast %23 : vector<1x24xi1> to vector<1x24xi1>
      %52 = vector.broadcast %51 : vector<1x24xi1> to vector<2x24xi1>
      %53 = vector.shape_cast %33 : vector<2x1xf32> to vector<2x1xf32>
      %54 = vector.broadcast %53 : vector<2x1xf32> to vector<2x24xf32>
      %55 = arith.select %52, %54, %18 : vector<2x24xi1>, vector<2x24xf32>
      %56 = vector.shape_cast %23 : vector<1x24xi1> to vector<1x24xi1>
      %57 = vector.broadcast %56 : vector<1x24xi1> to vector<2x24xi1>
      %58 = vector.shape_cast %50 : vector<2x1xf32> to vector<2x1xf32>
      %59 = vector.broadcast %58 : vector<2x1xf32> to vector<2x24xf32>
      %60 = arith.select %57, %59, %19 : vector<2x24xi1>, vector<2x24xf32>
      %61 = vector.shape_cast %25 : vector<1x128xi1> to vector<1x128xi1>
      %62 = vector.broadcast %61 : vector<1x128xi1> to vector<2x128xi1>
      %63 = vector.shape_cast %33 : vector<2x1xf32> to vector<2x1xf32>
      %64 = vector.broadcast %63 : vector<2x1xf32> to vector<2x128xf32>
      %65 = arith.select %62, %64, %20 : vector<2x128xi1>, vector<2x128xf32>
      %66 = vector.shape_cast %25 : vector<1x128xi1> to vector<1x128xi1>
      %67 = vector.broadcast %66 : vector<1x128xi1> to vector<2x128xi1>
      %68 = vector.shape_cast %48 : vector<2x1xf32> to vector<2x1xf32>
      %69 = vector.broadcast %68 : vector<2x1xf32> to vector<2x128xf32>
      %70 = arith.select %67, %69, %21 : vector<2x128xi1>, vector<2x128xf32>
      %c1_i32 = arith.constant 1 : i32
      %71 = vector.broadcast %c1_i32 : i32 to vector<1x24xi32>
      %72 = arith.cmpi eq, %15, %71 : vector<1x24xi32>
      %c1_i32_31 = arith.constant 1 : i32
      %73 = vector.broadcast %c1_i32_31 : i32 to vector<1x128xi32>
      %74 = arith.cmpi eq, %16, %73 : vector<1x128xi32>
      %cst_32 = arith.constant 0.000000e+00 : f32
      %75 = vector.shape_cast %72 : vector<1x24xi1> to vector<1x24xi1>
      %76 = vector.broadcast %75 : vector<1x24xi1> to vector<2x24xi1>
      %77 = vector.broadcast %cst_32 : f32 to vector<2x24xf32>
      %78 = arith.select %76, %14, %77 : vector<2x24xi1>, vector<2x24xf32>
      %cst_33 = arith.constant dense<0.000000e+00> : vector<2xf32>
      %79 = vector.multi_reduction <add>, %78, %cst_33 [1] : vector<2x24xf32> to vector<2xf32>
      %80 = vector.shape_cast %79 : vector<2xf32> to vector<2x1xf32>
      %cst_34 = arith.constant 1.250000e-01 : f32
      %81 = vector.broadcast %cst_34 : f32 to vector<2x1xf32>
      %82 = arith.mulf %80, %81 : vector<2x1xf32>
      %cst_35 = arith.constant 0.000000e+00 : f32
      %83 = vector.shape_cast %72 : vector<1x24xi1> to vector<1x24xi1>
      %84 = vector.broadcast %83 : vector<1x24xi1> to vector<2x24xi1>
      %85 = vector.broadcast %cst_35 : f32 to vector<2x24xf32>
      %86 = arith.select %84, %17, %85 : vector<2x24xi1>, vector<2x24xf32>
      %cst_36 = arith.constant dense<0.000000e+00> : vector<2xf32>
      %87 = vector.multi_reduction <add>, %86, %cst_36 [1] : vector<2x24xf32> to vector<2xf32>
      %88 = vector.shape_cast %87 : vector<2xf32> to vector<2x1xf32>
      %cst_37 = arith.constant 1.250000e-01 : f32
      %89 = vector.broadcast %cst_37 : f32 to vector<2x1xf32>
      %90 = arith.mulf %88, %89 : vector<2x1xf32>
      %91 = arith.mulf %82, %82 : vector<2x1xf32>
      %92 = arith.subf %90, %91 : vector<2x1xf32>
      %cst_38 = arith.constant 0.000000e+00 : f32
      %93 = vector.broadcast %cst_38 : f32 to vector<2x1xf32>
      %94 = arith.maximumf %92, %93 : vector<2x1xf32>
      %cst_39 = arith.constant 9.99999974E-6 : f32
      %95 = vector.broadcast %cst_39 : f32 to vector<2x1xf32>
      %96 = arith.addf %94, %95 : vector<2x1xf32>
      %97 = math.sqrt %96 : vector<2x1xf32>
      %cst_40 = arith.constant 1.000000e+00 : f32
      %98 = vector.broadcast %cst_40 : f32 to vector<2x1xf32>
      %99 = arith.divf %98, %97 : vector<2x1xf32>
      %100 = vector.shape_cast %72 : vector<1x24xi1> to vector<1x24xi1>
      %101 = vector.broadcast %100 : vector<1x24xi1> to vector<2x24xi1>
      %102 = vector.shape_cast %82 : vector<2x1xf32> to vector<2x1xf32>
      %103 = vector.broadcast %102 : vector<2x1xf32> to vector<2x24xf32>
      %104 = arith.select %101, %103, %55 : vector<2x24xi1>, vector<2x24xf32>
      %105 = vector.shape_cast %72 : vector<1x24xi1> to vector<1x24xi1>
      %106 = vector.broadcast %105 : vector<1x24xi1> to vector<2x24xi1>
      %107 = vector.shape_cast %99 : vector<2x1xf32> to vector<2x1xf32>
      %108 = vector.broadcast %107 : vector<2x1xf32> to vector<2x24xf32>
      %109 = arith.select %106, %108, %60 : vector<2x24xi1>, vector<2x24xf32>
      %110 = vector.shape_cast %74 : vector<1x128xi1> to vector<1x128xi1>
      %111 = vector.broadcast %110 : vector<1x128xi1> to vector<2x128xi1>
      %112 = vector.shape_cast %82 : vector<2x1xf32> to vector<2x1xf32>
      %113 = vector.broadcast %112 : vector<2x1xf32> to vector<2x128xf32>
      %114 = arith.select %111, %113, %65 : vector<2x128xi1>, vector<2x128xf32>
      %115 = vector.shape_cast %74 : vector<1x128xi1> to vector<1x128xi1>
      %116 = vector.broadcast %115 : vector<1x128xi1> to vector<2x128xi1>
      %117 = vector.shape_cast %97 : vector<2x1xf32> to vector<2x1xf32>
      %118 = vector.broadcast %117 : vector<2x1xf32> to vector<2x128xf32>
      %119 = arith.select %116, %118, %70 : vector<2x128xi1>, vector<2x128xf32>
      %c2_i32 = arith.constant 2 : i32
      %120 = vector.broadcast %c2_i32 : i32 to vector<1x24xi32>
      %121 = arith.cmpi eq, %15, %120 : vector<1x24xi32>
      %c2_i32_41 = arith.constant 2 : i32
      %122 = vector.broadcast %c2_i32_41 : i32 to vector<1x128xi32>
      %123 = arith.cmpi eq, %16, %122 : vector<1x128xi32>
      %cst_42 = arith.constant 0.000000e+00 : f32
      %124 = vector.shape_cast %121 : vector<1x24xi1> to vector<1x24xi1>
      %125 = vector.broadcast %124 : vector<1x24xi1> to vector<2x24xi1>
      %126 = vector.broadcast %cst_42 : f32 to vector<2x24xf32>
      %127 = arith.select %125, %14, %126 : vector<2x24xi1>, vector<2x24xf32>
      %cst_43 = arith.constant dense<0.000000e+00> : vector<2xf32>
      %128 = vector.multi_reduction <add>, %127, %cst_43 [1] : vector<2x24xf32> to vector<2xf32>
      %129 = vector.shape_cast %128 : vector<2xf32> to vector<2x1xf32>
      %cst_44 = arith.constant 1.250000e-01 : f32
      %130 = vector.broadcast %cst_44 : f32 to vector<2x1xf32>
      %131 = arith.mulf %129, %130 : vector<2x1xf32>
      %cst_45 = arith.constant 0.000000e+00 : f32
      %132 = vector.shape_cast %121 : vector<1x24xi1> to vector<1x24xi1>
      %133 = vector.broadcast %132 : vector<1x24xi1> to vector<2x24xi1>
      %134 = vector.broadcast %cst_45 : f32 to vector<2x24xf32>
      %135 = arith.select %133, %17, %134 : vector<2x24xi1>, vector<2x24xf32>
      %cst_46 = arith.constant dense<0.000000e+00> : vector<2xf32>
      %136 = vector.multi_reduction <add>, %135, %cst_46 [1] : vector<2x24xf32> to vector<2xf32>
      %137 = vector.shape_cast %136 : vector<2xf32> to vector<2x1xf32>
      %cst_47 = arith.constant 1.250000e-01 : f32
      %138 = vector.broadcast %cst_47 : f32 to vector<2x1xf32>
      %139 = arith.mulf %137, %138 : vector<2x1xf32>
      %140 = arith.mulf %131, %131 : vector<2x1xf32>
      %141 = arith.subf %139, %140 : vector<2x1xf32>
      %cst_48 = arith.constant 0.000000e+00 : f32
      %142 = vector.broadcast %cst_48 : f32 to vector<2x1xf32>
      %143 = arith.maximumf %141, %142 : vector<2x1xf32>
      %cst_49 = arith.constant 9.99999974E-6 : f32
      %144 = vector.broadcast %cst_49 : f32 to vector<2x1xf32>
      %145 = arith.addf %143, %144 : vector<2x1xf32>
      %146 = math.sqrt %145 : vector<2x1xf32>
      %cst_50 = arith.constant 1.000000e+00 : f32
      %147 = vector.broadcast %cst_50 : f32 to vector<2x1xf32>
      %148 = arith.divf %147, %146 : vector<2x1xf32>
      %149 = vector.shape_cast %121 : vector<1x24xi1> to vector<1x24xi1>
      %150 = vector.broadcast %149 : vector<1x24xi1> to vector<2x24xi1>
      %151 = vector.shape_cast %131 : vector<2x1xf32> to vector<2x1xf32>
      %152 = vector.broadcast %151 : vector<2x1xf32> to vector<2x24xf32>
      %153 = arith.select %150, %152, %104 : vector<2x24xi1>, vector<2x24xf32>
      %154 = vector.shape_cast %121 : vector<1x24xi1> to vector<1x24xi1>
      %155 = vector.broadcast %154 : vector<1x24xi1> to vector<2x24xi1>
      %156 = vector.shape_cast %148 : vector<2x1xf32> to vector<2x1xf32>
      %157 = vector.broadcast %156 : vector<2x1xf32> to vector<2x24xf32>
      %158 = arith.select %155, %157, %109 : vector<2x24xi1>, vector<2x24xf32>
      %159 = vector.shape_cast %123 : vector<1x128xi1> to vector<1x128xi1>
      %160 = vector.broadcast %159 : vector<1x128xi1> to vector<2x128xi1>
      %161 = vector.shape_cast %131 : vector<2x1xf32> to vector<2x1xf32>
      %162 = vector.broadcast %161 : vector<2x1xf32> to vector<2x128xf32>
      %163 = arith.select %160, %162, %114 : vector<2x128xi1>, vector<2x128xf32>
      %164 = vector.shape_cast %123 : vector<1x128xi1> to vector<1x128xi1>
      %165 = vector.broadcast %164 : vector<1x128xi1> to vector<2x128xi1>
      %166 = vector.shape_cast %146 : vector<2x1xf32> to vector<2x1xf32>
      %167 = vector.broadcast %166 : vector<2x1xf32> to vector<2x128xf32>
      %168 = arith.select %165, %167, %119 : vector<2x128xi1>, vector<2x128xf32>
      %c0_51 = arith.constant 0 : index
      %c0_52 = arith.constant 0 : index
      %169 = vector.load %arg12[%c0_51, %c0_52] : memref<2x128xf32, #tpu.memory_space<vmem>>, vector<2x128xf32>
      tpu.vector_store %arg12[%c0_51, %c0_52], %163 {strides = array<i32>} : memref<2x128xf32, #tpu.memory_space<vmem>>, vector<2x128xf32>,
      %c0_53 = arith.constant 0 : index
      %c0_54 = arith.constant 0 : index
      %170 = vector.load %arg13[%c0_53, %c0_54] : memref<2x128xf32, #tpu.memory_space<vmem>>, vector<2x128xf32>
      tpu.vector_store %arg13[%c0_53, %c0_54], %168 {strides = array<i32>} : memref<2x128xf32, #tpu.memory_space<vmem>>, vector<2x128xf32>,
      %cst_55 = arith.constant 0.000000e+00 : f32
      %171 = vector.broadcast %cst_55 : f32 to vector<2x64xf32>
      %c0_56 = arith.constant 0 : index
      %c0_57 = arith.constant 0 : index
      %172 = vector.load %arg14[%c0_56, %c0_57] : memref<2x64xf32, #tpu.memory_space<vmem>>, vector<2x64xf32>
      tpu.vector_store %arg14[%c0_56, %c0_57], %171 {strides = array<i32>} : memref<2x64xf32, #tpu.memory_space<vmem>>, vector<2x64xf32>,
      %173 = arith.subf %14, %153 : vector<2x24xf32>
      %174 = arith.mulf %173, %158 : vector<2x24xf32>
      %175 = arith.truncf %174 : vector<2x24xf32> to vector<2x24xbf16>
      %c0_58 = arith.constant 0 : index
      %c0_59 = arith.constant 0 : index
      %c0_60 = arith.constant 0 : index
      %176 = vector.load %arg11[%c0_58, %c0_59, %c0_60] : memref<1x2x24xbf16, #tpu.memory_space<vmem>>, vector<1x2x24xbf16>
      %177 = vector.shape_cast %176 : vector<1x2x24xbf16> to vector<2x24xbf16>
      %178 = vector.shape_cast %175 : vector<2x24xbf16> to vector<1x2x24xbf16>
      tpu.vector_store %arg11[%c0_58, %c0_59, %c0_60], %178 {strides = array<i32>} : memref<1x2x24xbf16, #tpu.memory_space<vmem>>, vector<1x2x24xbf16>,
    } else {
    }
    %c0 = arith.constant 0 : index
    %c0_1 = arith.constant 0 : index
    %3 = vector.load %arg14[%c0, %c0_1] : memref<2x64xf32, #tpu.memory_space<vmem>>, vector<2x64xf32>
    %4 = arith.index_cast %arg0 : i32 to index
    %c0_2 = arith.constant 0 : index
    %c0_3 = arith.constant 0 : index
    %5 = vector.load %arg11[%4, %c0_2, %c0_3] : memref<1x2x24xbf16, #tpu.memory_space<vmem>>, vector<1x2x24xbf16>
    %6 = vector.shape_cast %5 : vector<1x2x24xbf16> to vector<2x24xbf16>
    %c0_4 = arith.constant 0 : index
    %c0_5 = arith.constant 0 : index
    %7 = vector.load %arg4[%c0_4, %c0_5] : memref<24x64xbf16, #tpu.memory_space<vmem>>, vector<24x64xbf16>
    %cst = arith.constant dense<0.000000e+00> : vector<2x64xf32>
    %8 = tpu.matmul %6, %7, %cst {dimension_numbers = #tpu.dot_dimension_numbers<[1], [0], [0], [1], [0, 0, 1, 1], [], []>} : vector<2x24xbf16>, vector<24x64xbf16>, vector<2x64xf32> -> vector<2x64xf32>
    %9 = arith.addf %3, %8 : vector<2x64xf32>
    %c0_6 = arith.constant 0 : index
    %c0_7 = arith.constant 0 : index
    %10 = vector.load %arg14[%c0_6, %c0_7] : memref<2x64xf32, #tpu.memory_space<vmem>>, vector<2x64xf32>
    tpu.vector_store %arg14[%c0_6, %c0_7], %9 {strides = array<i32>} : memref<2x64xf32, #tpu.memory_space<vmem>>, vector<2x64xf32>,
    %c0_i32_8 = arith.constant 0 : i32
    %11 = arith.cmpi eq, %arg0, %c0_i32_8 : i32
    %12 = arith.extui %11 : i1 to i32
    %c0_i32_9 = arith.constant 0 : i32
    %13 = arith.cmpi ne, %12, %c0_i32_9 : i32
    scf.if %13 {
      %c0_10 = arith.constant 0 : index
      %c0_11 = arith.constant 0 : index
      %14 = vector.load %arg14[%c0_10, %c0_11] : memref<2x64xf32, #tpu.memory_space<vmem>>, vector<2x64xf32>
      %c0_12 = arith.constant 0 : index
      %c0_13 = arith.constant 0 : index
      %15 = vector.load %arg5[%c0_12, %c0_13] : memref<1x64xf32, #tpu.memory_space<vmem>>, vector<1x64xf32>
      %16 = vector.broadcast %15 : vector<1x64xf32> to vector<2x64xf32>
      %17 = arith.addf %14, %16 : vector<2x64xf32>
      %cst_14 = arith.constant 5.000000e-01 : f32
      %18 = vector.broadcast %cst_14 : f32 to vector<2x64xf32>
      %19 = arith.mulf %18, %17 : vector<2x64xf32>
      %cst_15 = arith.constant 0.707106769 : f32
      %20 = vector.broadcast %cst_15 : f32 to vector<2x64xf32>
      %21 = arith.mulf %17, %20 : vector<2x64xf32>
      %22 = math.erf %21 : vector<2x64xf32>
      %cst_16 = arith.constant 1.000000e+00 : f32
      %23 = vector.broadcast %cst_16 : f32 to vector<2x64xf32>
      %24 = arith.addf %23, %22 : vector<2x64xf32>
      %25 = arith.mulf %19, %24 : vector<2x64xf32>
      %26 = arith.truncf %25 : vector<2x64xf32> to vector<2x64xbf16>
      %c0_17 = arith.constant 0 : index
      %c0_18 = arith.constant 0 : index
      %27 = vector.load %arg6[%c0_17, %c0_18] : memref<64x64xbf16, #tpu.memory_space<vmem>>, vector<64x64xbf16>
      %cst_19 = arith.constant dense<0.000000e+00> : vector<2x64xf32>
      %28 = tpu.matmul %26, %27, %cst_19 {dimension_numbers = #tpu.dot_dimension_numbers<[1], [0], [0], [1], [0, 0, 1, 1], [], []>} : vector<2x64xbf16>, vector<64x64xbf16>, vector<2x64xf32> -> vector<2x64xf32>
      %c0_20 = arith.constant 0 : index
      %c0_21 = arith.constant 0 : index
      %29 = vector.load %arg7[%c0_20, %c0_21] : memref<1x64xf32, #tpu.memory_space<vmem>>, vector<1x64xf32>
      %30 = vector.broadcast %29 : vector<1x64xf32> to vector<2x64xf32>
      %31 = arith.addf %28, %30 : vector<2x64xf32>
      %cst_22 = arith.constant 5.000000e-01 : f32
      %32 = vector.broadcast %cst_22 : f32 to vector<2x64xf32>
      %33 = arith.mulf %32, %31 : vector<2x64xf32>
      %cst_23 = arith.constant 0.707106769 : f32
      %34 = vector.broadcast %cst_23 : f32 to vector<2x64xf32>
      %35 = arith.mulf %31, %34 : vector<2x64xf32>
      %36 = math.erf %35 : vector<2x64xf32>
      %cst_24 = arith.constant 1.000000e+00 : f32
      %37 = vector.broadcast %cst_24 : f32 to vector<2x64xf32>
      %38 = arith.addf %37, %36 : vector<2x64xf32>
      %39 = arith.mulf %33, %38 : vector<2x64xf32>
      %40 = arith.truncf %39 : vector<2x64xf32> to vector<2x64xbf16>
      %c0_25 = arith.constant 0 : index
      %c0_26 = arith.constant 0 : index
      %41 = vector.load %arg8[%c0_25, %c0_26] : memref<64x128xbf16, #tpu.memory_space<vmem>>, vector<64x128xbf16>
      %cst_27 = arith.constant dense<0.000000e+00> : vector<2x128xf32>
      %42 = tpu.matmul %40, %41, %cst_27 {dimension_numbers = #tpu.dot_dimension_numbers<[1], [0], [0], [1], [0, 0, 1, 1], [], []>} : vector<2x64xbf16>, vector<64x128xbf16>, vector<2x128xf32> -> vector<2x128xf32>
      %c0_28 = arith.constant 0 : index
      %c0_29 = arith.constant 0 : index
      %43 = vector.load %arg9[%c0_28, %c0_29] : memref<1x128xf32, #tpu.memory_space<vmem>>, vector<1x128xf32>
      %44 = vector.broadcast %43 : vector<1x128xf32> to vector<2x128xf32>
      %45 = arith.addf %42, %44 : vector<2x128xf32>
      %46 = vector.shape_cast %45 : vector<2x128xf32> to vector<1x2x128xf32>
      %c0_30 = arith.constant 0 : index
      %c0_31 = arith.constant 0 : index
      %47 = vector.load %arg13[%c0_30, %c0_31] : memref<2x128xf32, #tpu.memory_space<vmem>>, vector<2x128xf32>
      %48 = vector.shape_cast %47 : vector<2x128xf32> to vector<2x1x128xf32>
      %49 = vector.broadcast %46 : vector<1x2x128xf32> to vector<2x2x128xf32>
      %50 = vector.broadcast %48 : vector<2x1x128xf32> to vector<2x2x128xf32>
      %51 = arith.mulf %49, %50 : vector<2x2x128xf32>
      %c0_32 = arith.constant 0 : index
      %c0_33 = arith.constant 0 : index
      %52 = vector.load %arg12[%c0_32, %c0_33] : memref<2x128xf32, #tpu.memory_space<vmem>>, vector<2x128xf32>
      %53 = vector.shape_cast %52 : vector<2x128xf32> to vector<2x1x128xf32>
      %54 = vector.broadcast %53 : vector<2x1x128xf32> to vector<2x2x128xf32>
      %55 = arith.addf %51, %54 : vector<2x2x128xf32>
      %c0_34 = arith.constant 0 : index
      %c0_35 = arith.constant 0 : index
      %c0_36 = arith.constant 0 : index
      %56 = vector.load %arg10[%c0_34, %c0_35, %c0_36] : memref<2x2x128xf32, #tpu.memory_space<vmem>>, vector<2x2x128xf32>
      tpu.vector_store %arg10[%c0_34, %c0_35, %c0_36], %55 {strides = array<i32>} : memref<2x2x128xf32, #tpu.memory_space<vmem>>, vector<2x2x128xf32>,
    } else {
    }
    return
  }
  func.func @transform_0(%arg0: i32) -> (i32, i32) {
    %c0_i32 = arith.constant 0 : i32
    %c0_i32_0 = arith.constant 0 : i32
    %c0_i32_1 = arith.constant 0 : i32
    return %c0_i32, %c0_i32_0 : i32, i32
  }
  func.func @transform_1(%arg0: i32) -> (i32, i32) {
    %c0_i32 = arith.constant 0 : i32
    %c0_i32_0 = arith.constant 0 : i32
    %c0_i32_1 = arith.constant 0 : i32
    return %c0_i32, %c0_i32_0 : i32, i32
  }
  func.func @transform_2(%arg0: i32) -> (i32, i32) {
    %c0_i32 = arith.constant 0 : i32
    %c0_i32_0 = arith.constant 0 : i32
    %c0_i32_1 = arith.constant 0 : i32
    return %c0_i32, %c0_i32_0 : i32, i32
  }
  func.func @transform_3(%arg0: i32) -> (i32, i32) {
    %c0_i32 = arith.constant 0 : i32
    %c0_i32_0 = arith.constant 0 : i32
    return %arg0, %c0_i32 : i32, i32
  }
  func.func @transform_4(%arg0: i32) -> (i32, i32) {
    %c0_i32 = arith.constant 0 : i32
    %c0_i32_0 = arith.constant 0 : i32
    %c0_i32_1 = arith.constant 0 : i32
    return %c0_i32, %c0_i32_0 : i32, i32
  }
  func.func @transform_5(%arg0: i32) -> (i32, i32) {
    %c0_i32 = arith.constant 0 : i32
    %c0_i32_0 = arith.constant 0 : i32
    %c0_i32_1 = arith.constant 0 : i32
    return %c0_i32, %c0_i32_0 : i32, i32
  }
  func.func @transform_6(%arg0: i32) -> (i32, i32) {
    %c0_i32 = arith.constant 0 : i32
    %c0_i32_0 = arith.constant 0 : i32
    %c0_i32_1 = arith.constant 0 : i32
    return %c0_i32, %c0_i32_0 : i32, i32
  }
  func.func @transform_7(%arg0: i32) -> (i32, i32) {
    %c0_i32 = arith.constant 0 : i32
    %c0_i32_0 = arith.constant 0 : i32
    %c0_i32_1 = arith.constant 0 : i32
    return %c0_i32, %c0_i32_0 : i32, i32
  }
  func.func @transform_8(%arg0: i32) -> (i32, i32) {
    %c0_i32 = arith.constant 0 : i32
    %c0_i32_0 = arith.constant 0 : i32
    %c0_i32_1 = arith.constant 0 : i32
    return %c0_i32, %c0_i32_0 : i32, i32
  }
  func.func @transform_9(%arg0: i32) -> (i32, i32, i32) {
    %c0_i32 = arith.constant 0 : i32
    %c0_i32_0 = arith.constant 0 : i32
    %c0_i32_1 = arith.constant 0 : i32
    %c0_i32_2 = arith.constant 0 : i32
    return %c0_i32, %c0_i32_0, %c0_i32_1 : i32, i32, i32
  }
}

</mosaic_0001>

<llo_original>
// kernel: tpu_custom_call.1
$region0: #{tpu_custom_call.1}
  #allocation0 [shape = 'u32[]', space=smem, size = 0x4, offset = 0x4, fixed_abs, tag = 'smem constant byte address 0x4 - core index']
  #allocation1 [shape = 'u32[144,128]{1,0:T(1,128)}', space=vmem, size = 0x12000, scoped, tag = 'internal scratch']
  #allocation2 [shape = 'bf16[1,2,24]{2,1,0:T(2,128)(2,1)}', space=vmem, size = 0x200, scoped, tag = 'scratch operand']
  #allocation3 [shape = 'f32[2,128]{1,0:T(2,128)}', space=vmem, size = 0x400, scoped, tag = 'scratch operand']
  #allocation4 [shape = 'f32[2,128]{1,0:T(2,128)}', space=vmem, size = 0x400, scoped, tag = 'scratch operand']
  #allocation5 [shape = 'f32[2,64]{1,0:T(2,128)}', space=vmem, size = 0x400, scoped, tag = 'scratch operand']
  %s0 = inlined_call_operand.hbm [shape: f32[2,24], index: 0, kind: input, shape index: {}]
  %s1 = inlined_call_operand.vmem [shape: s32[1,24], index: 1, kind: input, shape index: {}]
  %s2 = inlined_call_operand.vmem [shape: s32[1,128], index: 2, kind: input, shape index: {}]
  %s3 = inlined_call_operand.hbm [shape: bf16[24,64], index: 3, kind: input, shape index: {}]
  %s4 = inlined_call_operand.vmem [shape: f32[1,64], index: 4, kind: input, shape index: {}]
  %s5 = inlined_call_operand.hbm [shape: bf16[64,64], index: 5, kind: input, shape index: {}]
  %s6 = inlined_call_operand.vmem [shape: f32[1,64], index: 6, kind: input, shape index: {}]
  %s7 = inlined_call_operand.hbm [shape: bf16[64,128], index: 7, kind: input, shape index: {}]
  %s8 = inlined_call_operand.vmem [shape: f32[1,128], index: 8, kind: input, shape index: {}]
  %s9 = inlined_call_operand.hbm [shape: f32[2,2,128], index: 9, kind: output, shape index: {}]
  %s10 = sld [smem:[#allocation0]]
  $region70: #{tpu_custom_call.1} parent=0
    _
  %s12 = ssub.s32 1, %s10
  %s13 = scalar_select 0, %s12, %s10
  $region1: #{tpu_custom_call.1} parent=0
    #allocation6 [shape = 'u8[1024]{0}', space=vmem, size = 0x400, scoped, tag = 'input window, operand 0, single buffered']
    #allocation7 [shape = 's32[1]{0}', space=sflag, size = 0x4, scoped, tag = 'scoped memory for tpu_custom_call.1']
    #allocation8 [shape = 's32[1]{0}', space=sflag, size = 0x4, scoped, tag = 'scoped memory for tpu_custom_call.1']
    #allocation9 [shape = 'u8[6144]{0}', space=vmem, size = 0x1800, scoped, tag = 'input window, operand 3, single buffered']
    #allocation10 [shape = 's32[1]{0}', space=sflag, size = 0x4, scoped, tag = 'scoped memory for tpu_custom_call.1']
    #allocation11 [shape = 'u8[16384]{0}', space=vmem, size = 0x4000, scoped, tag = 'input window, operand 5, single buffered']
    #allocation12 [shape = 'u8[16384]{0}', space=vmem, size = 0x4000, scoped, tag = 'input window, operand 7, single buffered']
    #allocation13 [shape = 's32[1]{0}', space=sflag, size = 0x4, scoped, tag = 'scoped memory for tpu_custom_call.1']
    #allocation14 [shape = 'u8[2048]{0}', space=vmem, size = 0x800, scoped, tag = 'output window, operand 0, single buffered']
    %14 = vsyncpa [#allocation7], 0
    %15 = vsyncpa [#allocation10], 0
    %16 = vsyncpa [#allocation13], 0
    %17 = vsyncpa [#allocation8], 0
    // Predicated region
    $region2: #{tpu_custom_call.1} parent=1 // pred_check
      _
    $region3: #{tpu_custom_call.1} parent=1 // pred_check_branch
      %19 = sbr.rel (0) target = $region5
    $region4: #{tpu_custom_call.1} parent=1 // pred_region
      %s21 = ssub.s32 32, 32
      %22 = vsyncadd [#allocation7], %s21
      %s24 = sshll.u32 [#allocation6], 4
      %s25 = int_to_ptr.vmem [resolvable:$true] %s24
      %27 = dma.hbm_to_vmem [thread:$0]  %s0, 32, %s25, [#allocation7]
    $region5: #{tpu_custom_call.1} parent=1 // pred_fallthru
      _
    // Predicated region
    $region6: #{tpu_custom_call.1} parent=1 // pred_check
      _
    $region7: #{tpu_custom_call.1} parent=1 // pred_check_branch
      %29 = sbr.rel (0) target = $region9
    $region8: #{tpu_custom_call.1} parent=1 // pred_region
      _
    $region9: #{tpu_custom_call.1} parent=1 // pred_fallthru
      _
    // Predicated region
    $region10: #{tpu_custom_call.1} parent=1 // pred_check
      _
    $region11: #{tpu_custom_call.1} parent=1 // pred_check_branch
      %31 = sbr.rel (0) target = $region13
    $region12: #{tpu_custom_call.1} parent=1 // pred_region
      _
    $region13: #{tpu_custom_call.1} parent=1 // pred_fallthru
      _
    // Predicated region
    $region14: #{tpu_custom_call.1} parent=1 // pred_check
      _
    $region15: #{tpu_custom_call.1} parent=1 // pred_check_branch
      %33 = sbr.rel (0) target = $region17
    $region16: #{tpu_custom_call.1} parent=1 // pred_region
      %s35 = ssub.s32 192, 192
      %36 = vsyncadd [#allocation10], %s35
      %s37 = sshll.u32 [#allocation9], 4
      %s38 = int_to_ptr.vmem [resolvable:$true] %s37
      %43 = dma.hbm_to_vmem [thread:$0]  %s3, 192, %s38, [#allocation10], 64, 64, 4
    $region17: #{tpu_custom_call.1} parent=1 // pred_fallthru
      _
    // Predicated region
    $region18: #{tpu_custom_call.1} parent=1 // pred_check
      _
    $region19: #{tpu_custom_call.1} parent=1 // pred_check_branch
      %45 = sbr.rel (0) target = $region21
    $region20: #{tpu_custom_call.1} parent=1 // pred_region
      _
    $region21: #{tpu_custom_call.1} parent=1 // pred_fallthru
      _
    // Predicated region
    $region22: #{tpu_custom_call.1} parent=1 // pred_check
      _
    $region23: #{tpu_custom_call.1} parent=1 // pred_check_branch
      %47 = sbr.rel (0) target = $region25
    $region24: #{tpu_custom_call.1} parent=1 // pred_region
      %s49 = ssub.s32 512, 512
      %50 = vsyncadd [#allocation10], %s49
      %s51 = sshll.u32 [#allocation11], 4
      %s52 = int_to_ptr.vmem [resolvable:$true] %s51
      %57 = dma.hbm_to_vmem [thread:$0]  %s5, 512, %s52, [#allocation10], 64, 64, 4
    $region25: #{tpu_custom_call.1} parent=1 // pred_fallthru
      _
    // Predicated region
    $region26: #{tpu_custom_call.1} parent=1 // pred_check
      _
    $region27: #{tpu_custom_call.1} parent=1 // pred_check_branch
      %59 = sbr.rel (0) target = $region29
    $region28: #{tpu_custom_call.1} parent=1 // pred_region
      _
    $region29: #{tpu_custom_call.1} parent=1 // pred_fallthru
      _
    // Predicated region
    $region30: #{tpu_custom_call.1} parent=1 // pred_check
      _
    $region31: #{tpu_custom_call.1} parent=1 // pred_check_branch
      %61 = sbr.rel (0) target = $region33
    $region32: #{tpu_custom_call.1} parent=1 // pred_region
      %s63 = ssub.s32 512, 512
      %64 = vsyncadd [#allocation13], %s63
      %s65 = sshll.u32 [#allocation12], 4
      %s66 = int_to_ptr.vmem [resolvable:$true] %s65
      %71 = dma.hbm_to_vmem [thread:$0]  %s7, 512, %s66, [#allocation13], 64, 64, 4
    $region33: #{tpu_custom_call.1} parent=1 // pred_fallthru
      _
    // Predicated region
    $region34: #{tpu_custom_call.1} parent=1 // pred_check
      _
    $region35: #{tpu_custom_call.1} parent=1 // pred_check_branch
      %73 = sbr.rel (0) target = $region37
    $region36: #{tpu_custom_call.1} parent=1 // pred_region
      _
    $region37: #{tpu_custom_call.1} parent=1 // pred_fallthru
      _
    // Predicated region
    $region38: #{tpu_custom_call.1} parent=1 // pred_check
      _
    $region39: #{tpu_custom_call.1} parent=1 // pred_check_branch
      %75 = sbr.rel (0) target = $region41
    $region40: #{tpu_custom_call.1} parent=1 // pred_region
      %76 = dma.done [#allocation7], 32
    $region41: #{tpu_custom_call.1} parent=1 // pred_fallthru
      _
    // Predicated region
    $region42: #{tpu_custom_call.1} parent=1 // pred_check
      _
    $region43: #{tpu_custom_call.1} parent=1 // pred_check_branch
      %78 = sbr.rel (0) target = $region45
    $region44: #{tpu_custom_call.1} parent=1 // pred_region
      %79 = dma.done [#allocation10], 192
    $region45: #{tpu_custom_call.1} parent=1 // pred_fallthru
      _
    // Predicated region
    $region46: #{tpu_custom_call.1} parent=1 // pred_check
      _
    $region47: #{tpu_custom_call.1} parent=1 // pred_check_branch
      %81 = sbr.rel (0) target = $region49
    $region48: #{tpu_custom_call.1} parent=1 // pred_region
      %82 = dma.done [#allocation10], 512
    $region49: #{tpu_custom_call.1} parent=1 // pred_fallthru
      _
    // Predicated region
    $region50: #{tpu_custom_call.1} parent=1 // pred_check
      _
    $region51: #{tpu_custom_call.1} parent=1 // pred_check_branch
      %84 = sbr.rel (0) target = $region53
    $region52: #{tpu_custom_call.1} parent=1 // pred_region
      %85 = dma.done [#allocation13], 512
    $region53: #{tpu_custom_call.1} parent=1 // pred_fallthru
      _
    %p87 = scmp.eq.s32.totalorder 0, 0
    // Predicated region
    $region54: #{tpu_custom_call.1} parent=1 // pred_check
      %p88 = pneg %p87
    $region55: #{tpu_custom_call.1} parent=1 // pred_check_branch
      %90 = sbr.rel (%p88) target = $region57
    $region56: #{tpu_custom_call.1} parent=1 // pred_region
      %v91 = vld [vmem:[#allocation6] sm:$0x3]
      %v92 = vld [vmem:[%s1] sm:$0x1]
      %v93 = vld [vmem:[%s2] sm:$0x1]
      %v94 = vmul.f32 %v91, %v91
      %vm95 = vcmp.eq.s32.totalorder %v92, 0
      %vm96 = vcmp.eq.s32.totalorder %v93, 0
      %v97 = vsel %vm95, 1, 0
      %v98 = vlaneseq
      %v99 = vshrl.u32 %v98, 7
      %v100 = vsub.s32 0, %v99
      %v101 = vrot.slane %v97, %v100
      %vm102 = vcmp.eq.s32.totalorder %v101, 1
      %v103 = vsel %vm102, %v91, 0.0
      %vm104 = vcmask 189440
      %v105 = vsel %vm104, %v103, 0.0
      %106 = vadd.xlane.f32.xlu0 %v105
      %v107 = vpop.xlane.xlu0 %106
      %v108 = vmul.f32 %v107, 0.125
      %v109 = vsel %vm102, %v94, 0.0
      %v110 = vsel %vm104, %v109, 0.0
      %111 = vadd.xlane.f32.xlu0 %v110
      %v112 = vpop.xlane.xlu0 %111
      %v113 = vmul.f32 %v112, 0.125
      %v114 = vmul.f32 %v108, %v108
      %v115 = vsub.f32 %v113, %v114
      %v116 = vmax.f32 %v115, 0.0
      %v117 = vadd.f32 %v116, 1e-05
      %v118 = vrsqrt.pop %v117
      %v119 = vmul.f32 %v117, %v118
      %vm120 = vcmp.eq.f32.partialorder %v117, inf
      %v121 = vsel %vm120, %v117, %v119
      %vm122 = vcmp.eq.f32.partialorder %v117, 0.0
      %v123 = vand.u32 %v117, 2147483648
      %v124 = vsel %vm122, %v123, %v121
      %v125 = vrcp.pop %v124
      %v126 = vmul.f32 1.0, %v125
      %v127 = vsel %vm102, %v108, 0.0
      %v128 = vsel %vm102, %v126, 0.0
      %v129 = vsel %vm96, 1, 0
      %v130 = vlaneseq
      %v131 = vshrl.u32 %v130, 7
      %v132 = vsub.s32 0, %v131
      %v133 = vrot.slane %v129, %v132
      %vm134 = vcmp.eq.s32.totalorder %v133, 1
      %v135 = vsel %vm134, %v108, 0.0
      %v136 = vsel %vm134, %v124, 0.0
      %vm137 = vcmp.eq.s32.totalorder %v92, 1
      %vm138 = vcmp.eq.s32.totalorder %v93, 1
      %v139 = vsel %vm137, 1, 0
      %v140 = vlaneseq
      %v141 = vshrl.u32 %v140, 7
      %v142 = vsub.s32 0, %v141
      %v143 = vrot.slane %v139, %v142
      %vm144 = vcmp.eq.s32.totalorder %v143, 1
      %v145 = vsel %vm144, %v91, 0.0
      %v146 = vsel %vm104, %v145, 0.0
      %147 = vadd.xlane.f32.xlu0 %v146
      %v148 = vpop.xlane.xlu0 %147
      %v149 = vmul.f32 %v148, 0.125
      %v150 = vsel %vm144, %v94, 0.0
      %v151 = vsel %vm104, %v150, 0.0
      %152 = vadd.xlane.f32.xlu0 %v151
      %v153 = vpop.xlane.xlu0 %152
      %v154 = vmul.f32 %v153, 0.125
      %v155 = vmul.f32 %v149, %v149
      %v156 = vsub.f32 %v154, %v155
      %v157 = vmax.f32 %v156, 0.0
      %v158 = vadd.f32 %v157, 1e-05
      %v159 = vrsqrt.pop %v158
      %v160 = vmul.f32 %v158, %v159
      %vm161 = vcmp.eq.f32.partialorder %v158, inf
      %v162 = vsel %vm161, %v158, %v160
      %vm163 = vcmp.eq.f32.partialorder %v158, 0.0
      %v164 = vand.u32 %v158, 2147483648
      %v165 = vsel %vm163, %v164, %v162
      %v166 = vrcp.pop %v165
      %v167 = vmul.f32 1.0, %v166
      %v168 = vsel %vm144, %v149, %v127
      %v169 = vsel %vm144, %v167, %v128
      %v170 = vsel %vm138, 1, 0
      %v171 = vlaneseq
      %v172 = vshrl.u32 %v171, 7
      %v173 = vsub.s32 0, %v172
      %v174 = vrot.slane %v170, %v173
      %vm175 = vcmp.eq.s32.totalorder %v174, 1
      %v176 = vsel %vm175, %v149, %v135
      %v177 = vsel %vm175, %v165, %v136
      %vm178 = vcmp.eq.s32.totalorder %v92, 2
      %vm179 = vcmp.eq.s32.totalorder %v93, 2
      %v180 = vsel %vm178, 1, 0
      %v181 = vlaneseq
      %v182 = vshrl.u32 %v181, 7
      %v183 = vsub.s32 0, %v182
      %v184 = vrot.slane %v180, %v183
      %vm185 = vcmp.eq.s32.totalorder %v184, 1
      %v186 = vsel %vm185, %v91, 0.0
      %v187 = vsel %vm104, %v186, 0.0
      %188 = vadd.xlane.f32.xlu0 %v187
      %v189 = vpop.xlane.xlu0 %188
      %v190 = vmul.f32 %v189, 0.125
      %v191 = vsel %vm185, %v94, 0.0
      %v192 = vsel %vm104, %v191, 0.0
      %193 = vadd.xlane.f32.xlu0 %v192
      %v194 = vpop.xlane.xlu0 %193
      %v195 = vmul.f32 %v194, 0.125
      %v196 = vmul.f32 %v190, %v190
      %v197 = vsub.f32 %v195, %v196
      %v198 = vmax.f32 %v197, 0.0
      %v199 = vadd.f32 %v198, 1e-05
      %v200 = vrsqrt.pop %v199
      %v201 = vmul.f32 %v199, %v200
      %vm202 = vcmp.eq.f32.partialorder %v199, inf
      %v203 = vsel %vm202, %v199, %v201
      %vm204 = vcmp.eq.f32.partialorder %v199, 0.0
      %v205 = vand.u32 %v199, 2147483648
      %v206 = vsel %vm204, %v205, %v203
      %v207 = vrcp.pop %v206
      %v208 = vmul.f32 1.0, %v207
      %v209 = vsel %vm185, %v190, %v168
      %v210 = vsel %vm185, %v208, %v169
      %v211 = vsel %vm179, 1, 0
      %v212 = vlaneseq
      %v213 = vshrl.u32 %v212, 7
      %v214 = vsub.s32 0, %v213
      %v215 = vrot.slane %v211, %v214
      %vm216 = vcmp.eq.s32.totalorder %v215, 1
      %v217 = vsel %vm216, %v190, %v176
      %v218 = vsel %vm216, %v206, %v177
      %219 = vst [vmem:[#allocation3] sm:$0x3] %v217
      %220 = vst [vmem:[#allocation4] sm:$0x3] %v218
      %vm221 = vcmask 517120
      %222 = vst.msk [vmem:[#allocation5] sm:$0x3] %vm221, 0.0
      %v223 = vsub.f32 %v91, %v209
      %v224 = vmul.f32 %v223, %v210
      %v225 = vpack.c.bf16 %v224, %v224
      %vm226 = vcmask 188416
      %227 = vst.msk [vmem:[#allocation2] sm:$0x1] %vm226, %v225
    $region57: #{tpu_custom_call.1} parent=1 // pred_fallthru
      _
    %v228 = vld [vmem:[#allocation5] sm:$0x3]
    %v229 = vld [vmem:[#allocation2] sm:$0x1]
    %v230 = vld [vmem:[#allocation9] sm:$0xf]
    %v231 = vld [vmem:[#allocation9 + $0x4] sm:$0xf]
    %v232 = vld [vmem:[#allocation9 + $0x8] sm:$0xf]
    %v236 = vunpack.c.l.b16 %v230
    %v237 = vunpack.c.l.b16 %v231
    %v238 = vunpack.c.l.b16 %v232
    %v239 = vpack.c.b16 %v237, %v236
    %v240 = vpack.c.b16 %v238, %v238
    %vm242 = vcmask 195584
    %v244 = vsel %vm242, %v229, 0
    %vm246 = vcmask 1043456
    %v248 = vsel %vm246, %v240, 0
    %250 = vmatprep.subr.bf16.mxu0 0
    %251 = vmatpush1.bf16.msra.mxu0 %v239
    %252 = vmatprep.subr.bf16.mxu0 0
    %253 = vmatpush1.bf16.msra.mxu0 %v248
    %254 = vmatprep.subr.bf16.mxu0 0
    %255 = vmatpush1.bf16.msra.mxu0 0
    %256 = vmatprep.subr.bf16.mxu0 0
    %257 = vmatpush1.bf16.msra.mxu0 0
    %258 = vmatprep.subr.bf16.mxu0 0
    %259 = vmatpush1.bf16.msra.mxu0 0
    %260 = vmatprep.subr.bf16.mxu0 0
    %261 = vmatpush1.bf16.msra.mxu0 0
    %262 = vmatprep.subr.bf16.mxu0 0
    %263 = vmatpush1.bf16.msra.mxu0 0
    %264 = vmatprep.subr.bf16.mxu0 0
    %265 = vmatpush1.bf16.msra.mxu0 0
    %266 = vmatprep.subr.bf16.mxu0 0
    %267 = vmatpush1.bf16.msra.mxu0 0
    %268 = vmatprep.subr.bf16.mxu0 0
    %269 = vmatpush1.bf16.msra.mxu0 0
    %270 = vmatprep.subr.bf16.mxu0 0
    %271 = vmatpush1.bf16.msra.mxu0 0
    %272 = vmatprep.subr.bf16.mxu0 0
    %273 = vmatpush1.bf16.msra.mxu0 0
    %274 = vmatprep.subr.bf16.mxu0 0
    %275 = vmatpush1.bf16.msra.mxu0 0
    %276 = vmatprep.subr.bf16.mxu0 0
    %277 = vmatpush1.bf16.msra.mxu0 0
    %278 = vmatprep.subr.bf16.mxu0 0
    %279 = vmatpush1.bf16.msra.mxu0 0
    %280 = vmatprep.subr.bf16.mxu0 0
    %281 = vmatpush1.bf16.msra.mxu0 0
    %282 = vmatprep.mubr.bf16.mxu0 0
    %283 = vmatmul.mubr.bf16.gmra.mrb[0].mxu0 %v244
    %v284 = vpop.f32.mrb[0].mxu0
    %v285 = vadd.f32 0.0, %v284
    %v286 = vpop.f32.mrb[0].mxu0
    %v287 = vpop.f32.mrb[0].mxu0
    %v288 = vpop.f32.mrb[0].mxu0
    %289 = vdwg.mxu0
    %v290 = vadd.f32 %v228, %v285
    %vm291 = vcmask 517120
    %292 = vst.msk [vmem:[#allocation5] sm:$0x3] %vm291, %v290
    // Predicated region
    $region58: #{tpu_custom_call.1} parent=1 // pred_check
      %p293 = pneg %p87
    $region59: #{tpu_custom_call.1} parent=1 // pred_check_branch
      %295 = sbr.rel (%p293) target = $region61
    $region60: #{tpu_custom_call.1} parent=1 // pred_region
      %v296 = vld [vmem:[#allocation5] sm:$0x3]
      %v297 = vld [vmem:[%s4] sm:$0x1]
      %v299 = vlaneseq
      %v300 = vshrl.u32 %v299, 7
      %v301 = vsub.s32 0, %v300
      %v302 = vrot.slane %v297, %v301
      %v304 = vadd.f32 %v296, %v302
      %v305 = vmul.f32 %v304, 0.5
      %v306 = vmul.f32 %v304, 0.70710677
      %v307 = verf.f32.pop %v306
      %v308 = vadd.f32 %v307, 1.0
      %v309 = vmul.f32 %v305, %v308
      %v310 = vpack.c.bf16 %v309, %v309
      %v311 = vld [vmem:[#allocation11] sm:$0xf]
      %v312 = vld [vmem:[#allocation11 + $0x4] sm:$0xf]
      %v313 = vld [vmem:[#allocation11 + $0x8] sm:$0xf]
      %v314 = vld [vmem:[#allocation11 + $0xc] sm:$0xf]
      %v315 = vld [vmem:[#allocation11 + $0x10] sm:$0xf]
      %v316 = vld [vmem:[#allocation11 + $0x14] sm:$0xf]
      %v317 = vld [vmem:[#allocation11 + $0x18] sm:$0xf]
      %v318 = vld [vmem:[#allocation11 + $0x1c] sm:$0xf]
      %v319 = vld [vmem:[%s6] sm:$0x1]
      %v321 = vlaneseq
      %v322 = vshrl.u32 %v321, 7
      %v323 = vsub.s32 0, %v322
      %v324 = vrot.slane %v319, %v323
      %v334 = vunpack.c.l.b16 %v311
      %v335 = vunpack.c.l.b16 %v312
      %v336 = vunpack.c.l.b16 %v313
      %v337 = vunpack.c.l.b16 %v314
      %v338 = vunpack.c.l.b16 %v315
      %v339 = vunpack.c.l.b16 %v316
      %v340 = vunpack.c.l.b16 %v317
      %v341 = vunpack.c.l.b16 %v318
      %v342 = vpack.c.b16 %v335, %v334
      %v343 = vpack.c.b16 %v337, %v336
      %v344 = vpack.c.b16 %v339, %v338
      %v345 = vpack.c.b16 %v341, %v340
      %vm350 = vcmask 523264
      %v352 = vsel %vm350, %v310, 0
      %354 = vmatprep.subr.bf16.mxu0 0
      %355 = vmatpush1.bf16.msra.mxu0 %v342
      %356 = vmatprep.subr.bf16.mxu0 0
      %357 = vmatpush1.bf16.msra.mxu0 %v343
      %358 = vmatprep.subr.bf16.mxu0 0
      %359 = vmatpush1.bf16.msra.mxu0 %v344
      %360 = vmatprep.subr.bf16.mxu0 0
      %361 = vmatpush1.bf16.msra.mxu0 %v345
      %362 = vmatprep.subr.bf16.mxu0 0
      %363 = vmatpush1.bf16.msra.mxu0 0
      %364 = vmatprep.subr.bf16.mxu0 0
      %365 = vmatpush1.bf16.msra.mxu0 0
      %366 = vmatprep.subr.bf16.mxu0 0
      %367 = vmatpush1.bf16.msra.mxu0 0
      %368 = vmatprep.subr.bf16.mxu0 0
      %369 = vmatpush1.bf16.msra.mxu0 0
      %370 = vmatprep.subr.bf16.mxu0 0
      %371 = vmatpush1.bf16.msra.mxu0 0
      %372 = vmatprep.subr.bf16.mxu0 0
      %373 = vmatpush1.bf16.msra.mxu0 0
      %374 = vmatprep.subr.bf16.mxu0 0
      %375 = vmatpush1.bf16.msra.mxu0 0
      %376 = vmatprep.subr.bf16.mxu0 0
      %377 = vmatpush1.bf16.msra.mxu0 0
      %378 = vmatprep.subr.bf16.mxu0 0
      %379 = vmatpush1.bf16.msra.mxu0 0
      %380 = vmatprep.subr.bf16.mxu0 0
      %381 = vmatpush1.bf16.msra.mxu0 0
      %382 = vmatprep.subr.bf16.mxu0 0
      %383 = vmatpush1.bf16.msra.mxu0 0
      %384 = vmatprep.subr.bf16.mxu0 0
      %385 = vmatpush1.bf16.msra.mxu0 0
      %386 = vmatprep.mubr.bf16.mxu0 0
      %387 = vmatmul.mubr.bf16.gmra.mrb[0].mxu0 %v352
      %v388 = vpop.f32.mrb[0].mxu0
      %v389 = vadd.f32 %v324, %v388
      %v390 = vpop.f32.mrb[0].mxu0
      %v391 = vpop.f32.mrb[0].mxu0
      %v392 = vpop.f32.mrb[0].mxu0
      %393 = vdwg.mxu0
      %v394 = vmul.f32 %v389, 0.5
      %v395 = vmul.f32 %v389, 0.70710677
      %v396 = verf.f32.pop %v395
      %v397 = vadd.f32 %v396, 1.0
      %v398 = vmul.f32 %v394, %v397
      %v399 = vpack.c.bf16 %v398, %v398
      %v400 = vld [vmem:[#allocation12] sm:$0xf]
      %v401 = vld [vmem:[#allocation12 + $0x4] sm:$0xf]
      %v402 = vld [vmem:[#allocation12 + $0x8] sm:$0xf]
      %v403 = vld [vmem:[#allocation12 + $0xc] sm:$0xf]
      %v404 = vld [vmem:[#allocation12 + $0x10] sm:$0xf]
      %v405 = vld [vmem:[#allocation12 + $0x14] sm:$0xf]
      %v406 = vld [vmem:[#allocation12 + $0x18] sm:$0xf]
      %v407 = vld [vmem:[#allocation12 + $0x1c] sm:$0xf]
      %v408 = vld [vmem:[%s8] sm:$0x1]
      %v410 = vlaneseq
      %v411 = vshrl.u32 %v410, 7
      %v412 = vsub.s32 0, %v411
      %v413 = vrot.slane %v408, %v412
      %v423 = vunpack.c.l.b16 %v400
      %v424 = vunpack.c.l.b16 %v401
      %v425 = vunpack.c.l.b16 %v402
      %v426 = vunpack.c.l.b16 %v403
      %v427 = vunpack.c.l.b16 %v404
      %v428 = vunpack.c.l.b16 %v405
      %v429 = vunpack.c.l.b16 %v406
      %v430 = vunpack.c.l.b16 %v407
      %v431 = vpack.c.b16 %v424, %v423
      %v432 = vpack.c.b16 %v426, %v425
      %v433 = vpack.c.b16 %v428, %v427
      %v434 = vpack.c.b16 %v430, %v429
      %v440 = vsel %vm350, %v399, 0
      %442 = vmatprep.subr.bf16.mxu0 0
      %443 = vmatpush1.bf16.msra.mxu0 %v431
      %444 = vmatprep.subr.bf16.mxu0 0
      %445 = vmatpush1.bf16.msra.mxu0 %v432
      %446 = vmatprep.subr.bf16.mxu0 0
      %447 = vmatpush1.bf16.msra.mxu0 %v433
      %448 = vmatprep.subr.bf16.mxu0 0
      %449 = vmatpush1.bf16.msra.mxu0 %v434
      %450 = vmatprep.subr.bf16.mxu0 0
      %451 = vmatpush1.bf16.msra.mxu0 0
      %452 = vmatprep.subr.bf16.mxu0 0
      %453 = vmatpush1.bf16.msra.mxu0 0
      %454 = vmatprep.subr.bf16.mxu0 0
      %455 = vmatpush1.bf16.msra.mxu0 0
      %456 = vmatprep.subr.bf16.mxu0 0
      %457 = vmatpush1.bf16.msra.mxu0 0
      %458 = vmatprep.subr.bf16.mxu0 0
      %459 = vmatpush1.bf16.msra.mxu0 0
      %460 = vmatprep.subr.bf16.mxu0 0
      %461 = vmatpush1.bf16.msra.mxu0 0
      %462 = vmatprep.subr.bf16.mxu0 0
      %463 = vmatpush1.bf16.msra.mxu0 0
      %464 = vmatprep.subr.bf16.mxu0 0
      %465 = vmatpush1.bf16.msra.mxu0 0
      %466 = vmatprep.subr.bf16.mxu0 0
      %467 = vmatpush1.bf16.msra.mxu0 0
      %468 = vmatprep.subr.bf16.mxu0 0
      %469 = vmatpush1.bf16.msra.mxu0 0
      %470 = vmatprep.subr.bf16.mxu0 0
      %471 = vmatpush1.bf16.msra.mxu0 0
      %472 = vmatprep.subr.bf16.mxu0 0
      %473 = vmatpush1.bf16.msra.mxu0 0
      %474 = vmatprep.mubr.bf16.mxu0 0
      %475 = vmatmul.mubr.bf16.gmra.mrb[0].mxu0 %v440
      %v476 = vpop.f32.mrb[0].mxu0
      %v477 = vadd.f32 %v413, %v476
      %v478 = vpop.f32.mrb[0].mxu0
      %v479 = vpop.f32.mrb[0].mxu0
      %v480 = vpop.f32.mrb[0].mxu0
      %481 = vdwg.mxu0
      %v482 = vld [vmem:[#allocation4] sm:$0x3]
      %v485 = vunpack.c.l.s4 1966171168
      %v486 = vunpack.c.0.s8 %v485
      %v487 = vlaneseq
      %v488 = vshrl.u32 %v487, 7
      %v489 = vsub.s32 %v486, %v488
      %v490 = vrot.slane %v482, %v489
      %v491 = vcombine.high %v490, %v490
      %v493 = vunpack.c.l.s4 1966171168
      %v494 = vunpack.c.0.s8 %v493
      %v495 = vlaneseq
      %v496 = vshrl.u32 %v495, 7
      %v497 = vsub.s32 %v494, %v496
      %v498 = vrot.slane %v490, %v497
      %v500 = vunpack.c.l.s4 1966171168
      %v501 = vunpack.c.0.s8 %v500
      %v502 = vlaneseq
      %v503 = vshrl.u32 %v502, 7
      %v504 = vsub.s32 %v501, %v503
      %v505 = vrot.slane %v491, %v504
      %v506 = vlaneseq
      %v507 = vshrl.u32 %v506, 7
      %v508 = vsub.s32 0, %v507
      %v509 = vrot.slane %v498, %v508
      %v510 = vlaneseq
      %v511 = vshrl.u32 %v510, 7
      %v512 = vsub.s32 0, %v511
      %v513 = vrot.slane %v505, %v512
      %v516 = vmul.f32 %v477, %v509
      %v517 = vmul.f32 %v477, %v513
      %v518 = vld [vmem:[#allocation3] sm:$0x3]
      %v521 = vunpack.c.l.s4 1966171168
      %v522 = vunpack.c.0.s8 %v521
      %v523 = vlaneseq
      %v524 = vshrl.u32 %v523, 7
      %v525 = vsub.s32 %v522, %v524
      %v526 = vrot.slane %v518, %v525
      %v527 = vcombine.high %v526, %v526
      %v529 = vunpack.c.l.s4 1966171168
      %v530 = vunpack.c.0.s8 %v529
      %v531 = vlaneseq
      %v532 = vshrl.u32 %v531, 7
      %v533 = vsub.s32 %v530, %v532
      %v534 = vrot.slane %v526, %v533
      %v536 = vunpack.c.l.s4 1966171168
      %v537 = vunpack.c.0.s8 %v536
      %v538 = vlaneseq
      %v539 = vshrl.u32 %v538, 7
      %v540 = vsub.s32 %v537, %v539
      %v541 = vrot.slane %v527, %v540
      %v542 = vlaneseq
      %v543 = vshrl.u32 %v542, 7
      %v544 = vsub.s32 0, %v543
      %v545 = vrot.slane %v534, %v544
      %v546 = vlaneseq
      %v547 = vshrl.u32 %v546, 7
      %v548 = vsub.s32 0, %v547
      %v549 = vrot.slane %v541, %v548
      %v552 = vadd.f32 %v516, %v545
      %v553 = vadd.f32 %v517, %v549
      %554 = vst [vmem:[#allocation14] sm:$0x3] %v552
      %555 = vst [vmem:[#allocation14 + $0x2] sm:$0x3] %v553
    $region61: #{tpu_custom_call.1} parent=1 // pred_fallthru
      _
    // Predicated region
    $region62: #{tpu_custom_call.1} parent=1 // pred_check
      _
    $region63: #{tpu_custom_call.1} parent=1 // pred_check_branch
      %557 = sbr.rel (0) target = $region65
    $region64: #{tpu_custom_call.1} parent=1 // pred_region
      %s559 = ssub.s32 64, 64
      %560 = vsyncadd [#allocation8], %s559
      %s561 = sshll.u32 [#allocation14], 4
      %s562 = int_to_ptr.vmem [resolvable:$true] %s561
      %567 = dma.vmem_to_hbm [thread:$0]  %s562, 64, %s9, [#allocation8], 32, 32, 2
    $region65: #{tpu_custom_call.1} parent=1 // pred_fallthru
      _
    // Predicated region
    $region66: #{tpu_custom_call.1} parent=1 // pred_check
      _
    $region67: #{tpu_custom_call.1} parent=1 // pred_check_branch
      %569 = sbr.rel (0) target = $region69
    $region68: #{tpu_custom_call.1} parent=1 // pred_region
      %570 = dma.done [#allocation8], 64
    $region69: #{tpu_custom_call.1} parent=1 // pred_fallthru
      _
    %571 = vsyncpa [#allocation7], 1
    %572 = vsyncpa [#allocation10], 1
    %573 = vsyncpa [#allocation13], 1
    %574 = vsyncpa [#allocation8], 1

</llo_original>
